<compile_context>
chip_gen: v5e
topology: v5e:2x2
jax: 0.10.0
libtpu: 0.0.40
codegen_flags: <defaults>
</compile_context>

<pallas_src>
import functools

import jax
import jax.numpy as jnp
from jax.experimental import pallas as pl
from jax.experimental.pallas import tpu as pltpu


# ----------------------------------------------------------------------------
# One-time parameter preparation (hoisted out of the forward call).
# ----------------------------------------------------------------------------
def prepare_params(params, num_heads):
    """Fuse q/k/v weights, fold in the softmax scale, cast weights to bf16."""
    H = params["wo"].shape[0]
    assert H % num_heads == 0, "num_heads must divide hidden_size"
    D = H // num_heads
    scale = 1.0 / (D ** 0.5)

    # PyTorch nn.Linear: y = x @ W^T + b.  Concatenate q/k/v along the output
    # dim, pre-transpose once, and fold the attention scale into the q slice.
    wqkv_t = jnp.concatenate(
        [params["wq"] * scale, params["wk"], params["wv"]], axis=0).T      # (H, 3H)
    bqkv = jnp.concatenate(
        [params["bq"] * scale, params["bk"], params["bv"]]).reshape(1, 3 * H)
    wo_t = params["wo"].T                                                  # (H, H)
    bo = params["bo"].reshape(1, H)

    return {
        "wqkv_t": wqkv_t.astype(jnp.bfloat16),   # bf16 MXU operands
        "wo_t": wo_t.astype(jnp.bfloat16),
        "bqkv": bqkv.astype(jnp.float32),        # biases stay f32 (added to f32 acc)
        "bo": bo.astype(jnp.float32),
    }


# ----------------------------------------------------------------------------
# Fused forward kernel: QKV projection + all-head attention + output projection.
# One grid step handles a (batch_chunk * S) row slab.
# ----------------------------------------------------------------------------
def _fused_attention_kernel(x_ref, wqkv_ref, bqkv_ref, wo_ref, bo_ref, o_ref,
                            *, num_heads, seq_len):
    xm = x_ref[...]                                 # (M, H) f32, M = Bc * S
    M, H = xm.shape
    Bc = M // seq_len
    D = H // num_heads

    # Fused QKV projection: one bf16 MXU matmul over the whole flattened slab,
    # f32 accumulation.  Scale is already folded into the q weight/bias.
    qkv = jnp.dot(xm.astype(jnp.bfloat16), wqkv_ref[...],
                  preferred_element_type=jnp.float32) + bqkv_ref[...]      # (M, 3H)

    def to_heads(t):                                # (M, H) -> (Bc*nh, S, D) bf16
        t = t.reshape(Bc, seq_len, num_heads, D)
        t = jnp.transpose(t, (0, 2, 1, 3))          # minor dim (D) unchanged
        return t.reshape(Bc * num_heads, seq_len, D).astype(jnp.bfloat16)

    q = to_heads(qkv[:, 0 * H:1 * H])
    k = to_heads(qkv[:, 1 * H:2 * H])
    v = to_heads(qkv[:, 2 * H:3 * H])

    # Scores for all (batch, head) pairs in a single batched MXU dot
    # (contract last dims; no explicit k transpose on the XLU).
    s = jnp.einsum("bqd,bkd->bqk", q, k,
                   preferred_element_type=jnp.float32)                     # (Bc*nh, S, S)
    s = s - jnp.max(s, axis=-1, keepdims=True)
    p = jnp.exp(s)
    # Row normalisation as a multiply by the EUP approximate reciprocal.
    p = p * pl.reciprocal(jnp.sum(p, axis=-1, keepdims=True), approx=True)

    ctx = jnp.einsum("bqk,bkd->bqd", p.astype(jnp.bfloat16), v,
                     preferred_element_type=jnp.float32)                   # (Bc*nh, S, D)

    # Merge heads back to (M, H): one relayout, then the output projection.
    merged = jnp.transpose(ctx.reshape(Bc, num_heads, seq_len, D),
                           (0, 2, 1, 3)).reshape(M, H)
    out = jnp.dot(merged.astype(jnp.bfloat16), wo_ref[...],
                  preferred_element_type=jnp.float32) + bo_ref[...]        # (M, H)

    o_ref[...] = out


# ----------------------------------------------------------------------------
# Wrapper: single pallas_call over a trivially small grid.
# ----------------------------------------------------------------------------
def tiled_attention_forward(hidden_states, fused_params, num_heads, *,
                            batch_chunks=1):
    """hidden_states: (B, S, H) f32 -> (B, S, H) f32.

    batch_chunks=1 collapses the grid (right choice on single-TC v5e/v6e);
    set batch_chunks=2 on v7x to shard the batch across the two TensorCores.
    """
    B, S, H = hidden_states.shape
    assert H % num_heads == 0, "num_heads must divide hidden_size"
    assert B % batch_chunks == 0, "batch_chunks must divide batch"
    Mc = (B // batch_chunks) * S                   # rows per grid step

    x2d = hidden_states.reshape(B * S, H)          # free HBM reshape
    kernel = functools.partial(_fused_attention_kernel,
                               num_heads=num_heads, seq_len=S)

    out2d = pl.pallas_call(
        kernel,
        out_shape=jax.ShapeDtypeStruct((B * S, H), jnp.float32),
        grid=(batch_chunks,),
        in_specs=[
            pl.BlockSpec((Mc, H), lambda c: (c, 0)),          # activations
            pl.BlockSpec((H, 3 * H), lambda c: (0, 0)),       # fused qkv weight (bf16)
            pl.BlockSpec((1, 3 * H), lambda c: (0, 0)),       # fused qkv bias (f32)
            pl.BlockSpec((H, H), lambda c: (0, 0)),           # out weight (bf16)
            pl.BlockSpec((1, H), lambda c: (0, 0)),           # out bias (f32)
        ],
        out_specs=pl.BlockSpec((Mc, H), lambda c: (c, 0)),
        compiler_params=pltpu.CompilerParams(
            dimension_semantics=("parallel",),                 # megacore on v7x
            vmem_limit_bytes=32 * 1024 * 1024),
    )(x2d, fused_params["wqkv_t"], fused_params["bqkv"],
      fused_params["wo_t"], fused_params["bo"])

    return out2d.reshape(B, S, H)


# ----------------------------------------------------------------------------
# Pure-JAX f32 reference (same math as the PyTorch module) for a sanity check.
# ----------------------------------------------------------------------------
def reference_forward(hidden_states, params, num_heads):
    B, S, H = hidden_states.shape
    D = H // num_heads
    scale = 1.0 / (D ** 0.5)
    x2d = hidden_states.reshape(B * S, H)

    def lin(x, w, b):
        return x @ w.T + b

    def split(t):
        return t.reshape(B, S, num_heads, D).transpose(0, 2, 1, 3)

    q = split(lin(x2d, params["wq"], params["bq"]))
    k = split(lin(x2d, params["wk"], params["bk"]))
    v = split(lin(x2d, params["wv"], params["bv"]))

    s = jnp.einsum("bhqd,bhkd->bhqk", q, k) * scale
    p = jax.nn.softmax(s, axis=-1)
    o = jnp.einsum("bhqk,bhkd->bhqd", p, v)
    merged = o.transpose(0, 2, 1, 3).reshape(B * S, H)
    return lin(merged, params["wo"], params["bo"]).reshape(B, S, H)


if __name__ == "__main__":
    # Module config (small shapes consistent with the forward pass).
    batch = 2
    seq = 8
    hidden = 32
    num_heads = 4
    tile_size = 64  # noqa: F841  (torch tiled_matmul tile; math-identical to a plain matmul)

    key = jax.random.PRNGKey(0)
    ks = jax.random.split(key, 9)
    init = lambda k, shape: jax.random.normal(k, shape, jnp.float32) * 0.05

    params = {
        "wq": init(ks[0], (hidden, hidden)), "bq": init(ks[1], (hidden,)),
        "wk": init(ks[2], (hidden, hidden)), "bk": init(ks[3], (hidden,)),
        "wv": init(ks[4], (hidden, hidden)), "bv": init(ks[5], (hidden,)),
        "wo": init(ks[6], (hidden, hidden)), "bo": init(ks[7], (hidden,)),
    }

    x = jax.random.normal(ks[8], (batch, seq, hidden), jnp.float32)

    fused = prepare_params(params, num_heads)   # one-time weight prep (hoisted)
    out = tiled_attention_forward(x, fused, num_heads)
    out = jax.block_until_ready(out)

    ref = reference_forward(x, params, num_heads)
    assert out.shape == (batch, seq, hidden)
    # Tolerance accounts for bf16 MXU inputs (f32 accumulation) and the EUP
    # approximate reciprocal in the softmax normalisation.
    assert jnp.allclose(out, ref, atol=2e-2, rtol=2e-2), "mismatch vs reference"

    print("KERNEL_OK")
</pallas_src>

<mosaic_0001>
module attributes {stable_mosaic.version = 11 : i64} {
  func.func @_fused_attention_kernel(%arg0: i32, %arg1: memref<16x32xf32, #tpu.memory_space<vmem>>, %arg2: memref<32x96xbf16, #tpu.memory_space<vmem>>, %arg3: memref<1x96xf32, #tpu.memory_space<vmem>>, %arg4: memref<32x32xbf16, #tpu.memory_space<vmem>>, %arg5: memref<1x32xf32, #tpu.memory_space<vmem>>, %arg6: memref<16x32xf32, #tpu.memory_space<vmem>>) attributes {dimension_semantics = [#tpu.dimension_semantics<parallel>], iteration_bounds = array<i64: 1>, scalar_prefetch = 0 : i64, scratch_operands = 0 : i64, tpu.core_type = #tpu.core_type<tc>, window_params = [{transform_indices = @transform_0, window_bounds = array<i64: 16, 32>}, {pipeline_mode = #tpu.pipeline_mode<synchronous>, transform_indices = @transform_1, window_bounds = array<i64: 32, 96>}, {pipeline_mode = #tpu.pipeline_mode<synchronous>, transform_indices = @transform_2, window_bounds = array<i64: 1, 96>}, {pipeline_mode = #tpu.pipeline_mode<synchronous>, transform_indices = @transform_3, window_bounds = array<i64: 32, 32>}, {pipeline_mode = #tpu.pipeline_mode<synchronous>, transform_indices = @transform_4, window_bounds = array<i64: 1, 32>}, {transform_indices = @transform_5, window_bounds = array<i64: 16, 32>}]} {
    %c0 = arith.constant 0 : index
    %c0_0 = arith.constant 0 : index
    %0 = vector.load %arg1[%c0, %c0_0] : memref<16x32xf32, #tpu.memory_space<vmem>>, vector<16x32xf32>
    %1 = arith.truncf %0 : vector<16x32xf32> to vector<16x32xbf16>
    %c0_1 = arith.constant 0 : index
    %c0_2 = arith.constant 0 : index
    %2 = vector.load %arg2[%c0_1, %c0_2] : memref<32x96xbf16, #tpu.memory_space<vmem>>, vector<32x96xbf16>
    %cst = arith.constant dense<0.000000e+00> : vector<16x96xf32>
    %3 = tpu.matmul %1, %2, %cst {dimension_numbers = #tpu.dot_dimension_numbers<[1], [0], [0], [1], [0, 0, 1, 1], [], []>} : vector<16x32xbf16>, vector<32x96xbf16>, vector<16x96xf32> -> vector<16x96xf32>
    %c0_3 = arith.constant 0 : index
    %c0_4 = arith.constant 0 : index
    %4 = vector.load %arg3[%c0_3, %c0_4] : memref<1x96xf32, #tpu.memory_space<vmem>>, vector<1x96xf32>
    %5 = vector.broadcast %4 : vector<1x96xf32> to vector<16x96xf32>
    %6 = arith.addf %3, %5 : vector<16x96xf32>
    %7 = vector.extract_strided_slice %6 {offsets = [0, 0], sizes = [16, 32], strides = [1, 1]} : vector<16x96xf32> to vector<16x32xf32>
    %8 = vector.shape_cast %7 : vector<16x32xf32> to vector<2x8x4x8xf32>
    %9 = tpu.transpose %8, [0, 2, 1, 3] : vector<2x8x4x8xf32> -> vector<2x4x8x8xf32>
    %10 = vector.shape_cast %9 : vector<2x4x8x8xf32> to vector<8x8x8xf32>
    %11 = arith.truncf %10 : vector<8x8x8xf32> to vector<8x8x8xbf16>
    %12 = vector.extract_strided_slice %6 {offsets = [0, 32], sizes = [16, 32], strides = [1, 1]} : vector<16x96xf32> to vector<16x32xf32>
    %13 = vector.shape_cast %12 : vector<16x32xf32> to vector<2x8x4x8xf32>
    %14 = tpu.transpose %13, [0, 2, 1, 3] : vector<2x8x4x8xf32> -> vector<2x4x8x8xf32>
    %15 = vector.shape_cast %14 : vector<2x4x8x8xf32> to vector<8x8x8xf32>
    %16 = arith.truncf %15 : vector<8x8x8xf32> to vector<8x8x8xbf16>
    %17 = vector.extract_strided_slice %6 {offsets = [0, 64], sizes = [16, 32], strides = [1, 1]} : vector<16x96xf32> to vector<16x32xf32>
    %18 = vector.shape_cast %17 : vector<16x32xf32> to vector<2x8x4x8xf32>
    %19 = tpu.transpose %18, [0, 2, 1, 3] : vector<2x8x4x8xf32> -> vector<2x4x8x8xf32>
    %20 = vector.shape_cast %19 : vector<2x4x8x8xf32> to vector<8x8x8xf32>
    %21 = arith.truncf %20 : vector<8x8x8xf32> to vector<8x8x8xbf16>
    "tpu.trace_start"() <{level = 10 : i32, message = "bqd,bkd->bqk"}> : () -> ()
    %cst_5 = arith.constant dense<0.000000e+00> : vector<8x8x8xf32>
    %22 = tpu.matmul %11, %16, %cst_5 {dimension_numbers = #tpu.dot_dimension_numbers<[2], [2], [1], [1], [0, 0, 0, 1, 1, 1], [0], [0]>} : vector<8x8x8xbf16>, vector<8x8x8xbf16>, vector<8x8x8xf32> -> vector<8x8x8xf32>
    "tpu.trace_stop"() : () -> ()
    %cst_6 = arith.constant dense<0xFF800000> : vector<8x8xf32>
    %23 = vector.multi_reduction <maximumf>, %22, %cst_6 [2] : vector<8x8x8xf32> to vector<8x8xf32>
    %24 = vector.shape_cast %23 : vector<8x8xf32> to vector<8x8x1xf32>
    %25 = vector.broadcast %24 : vector<8x8x1xf32> to vector<8x8x8xf32>
    %26 = arith.subf %22, %25 : vector<8x8x8xf32>
    %27 = math.exp %26 : vector<8x8x8xf32>
    %cst_7 = arith.constant dense<0.000000e+00> : vector<8x8xf32>
    %28 = vector.multi_reduction <add>, %27, %cst_7 [2] : vector<8x8x8xf32> to vector<8x8xf32>
    %29 = vector.shape_cast %28 : vector<8x8xf32> to vector<8x8x1xf32>
    %30 = tpu.reciprocal %29 {approx = true} : vector<8x8x1xf32> -> vector<8x8x1xf32>
    %31 = vector.broadcast %30 : vector<8x8x1xf32> to vector<8x8x8xf32>
    %32 = arith.mulf %27, %31 : vector<8x8x8xf32>
    %33 = arith.truncf %32 : vector<8x8x8xf32> to vector<8x8x8xbf16>
    "tpu.trace_start"() <{level = 10 : i32, message = "bqk,bkd->bqd"}> : () -> ()
    %cst_8 = arith.constant dense<0.000000e+00> : vector<8x8x8xf32>
    %34 = tpu.matmul %33, %21, %cst_8 {dimension_numbers = #tpu.dot_dimension_numbers<[2], [1], [1], [2], [0, 0, 0, 1, 1, 2], [0], [0]>} : vector<8x8x8xbf16>, vector<8x8x8xbf16>, vector<8x8x8xf32> -> vector<8x8x8xf32>
    "tpu.trace_stop"() : () -> ()
    %35 = vector.shape_cast %34 : vector<8x8x8xf32> to vector<2x4x8x8xf32>
    %36 = tpu.transpose %35, [0, 2, 1, 3] : vector<2x4x8x8xf32> -> vector<2x8x4x8xf32>
    %37 = vector.shape_cast %36 : vector<2x8x4x8xf32> to vector<16x32xf32>
    %38 = arith.truncf %37 : vector<16x32xf32> to vector<16x32xbf16>
    %c0_9 = arith.constant 0 : index
    %c0_10 = arith.constant 0 : index
    %39 = vector.load %arg4[%c0_9, %c0_10] : memref<32x32xbf16, #tpu.memory_space<vmem>>, vector<32x32xbf16>
    %cst_11 = arith.constant dense<0.000000e+00> : vector<16x32xf32>
    %40 = tpu.matmul %38, %39, %cst_11 {dimension_numbers = #tpu.dot_dimension_numbers<[1], [0], [0], [1], [0, 0, 1, 1], [], []>} : vector<16x32xbf16>, vector<32x32xbf16>, vector<16x32xf32> -> vector<16x32xf32>
    %c0_12 = arith.constant 0 : index
    %c0_13 = arith.constant 0 : index
    %41 = vector.load %arg5[%c0_12, %c0_13] : memref<1x32xf32, #tpu.memory_space<vmem>>, vector<1x32xf32>
    %42 = vector.broadcast %41 : vector<1x32xf32> to vector<16x32xf32>
    %43 = arith.addf %40, %42 : vector<16x32xf32>
    %c0_14 = arith.constant 0 : index
    %c0_15 = arith.constant 0 : index
    %44 = vector.load %arg6[%c0_14, %c0_15] : memref<16x32xf32, #tpu.memory_space<vmem>>, vector<16x32xf32>
    tpu.vector_store %arg6[%c0_14, %c0_15], %43 {strides = array<i32>} : memref<16x32xf32, #tpu.memory_space<vmem>>, vector<16x32xf32>,
    return
  }
  func.func @transform_0(%arg0: i32) -> (i32, i32) {
    %c0_i32 = arith.constant 0 : i32
    %c0_i32_0 = arith.constant 0 : i32
    return %arg0, %c0_i32 : i32, i32
  }
  func.func @transform_1(%arg0: i32) -> (i32, i32) {
    %c0_i32 = arith.constant 0 : i32
    %c0_i32_0 = arith.constant 0 : i32
    %c0_i32_1 = arith.constant 0 : i32
    return %c0_i32, %c0_i32_0 : i32, i32
  }
  func.func @transform_2(%arg0: i32) -> (i32, i32) {
    %c0_i32 = arith.constant 0 : i32
    %c0_i32_0 = arith.constant 0 : i32
    %c0_i32_1 = arith.constant 0 : i32
    return %c0_i32, %c0_i32_0 : i32, i32
  }
  func.func @transform_3(%arg0: i32) -> (i32, i32) {
    %c0_i32 = arith.constant 0 : i32
    %c0_i32_0 = arith.constant 0 : i32
    %c0_i32_1 = arith.constant 0 : i32
    return %c0_i32, %c0_i32_0 : i32, i32
  }
  func.func @transform_4(%arg0: i32) -> (i32, i32) {
    %c0_i32 = arith.constant 0 : i32
    %c0_i32_0 = arith.constant 0 : i32
    %c0_i32_1 = arith.constant 0 : i32
    return %c0_i32, %c0_i32_0 : i32, i32
  }
  func.func @transform_5(%arg0: i32) -> (i32, i32) {
    %c0_i32 = arith.constant 0 : i32
    %c0_i32_0 = arith.constant 0 : i32
    return %arg0, %c0_i32 : i32, i32
  }
}

</mosaic_0001>

<llo_original>
// kernel: tpu_custom_call.1
$region0: #{tpu_custom_call.1}
  #allocation0 [shape = 'u32[]', space=smem, size = 0x4, offset = 0x4, fixed_abs, tag = 'smem constant byte address 0x4 - core index']
  #allocation1 [shape = 'u32[72,128]{1,0:T(1,128)}', space=vmem, size = 0x9000, scoped, tag = 'internal scratch']
  %s0 = inlined_call_operand.hbm [shape: f32[16,32], index: 0, kind: input, shape index: {}]
  %s1 = inlined_call_operand.hbm [shape: bf16[32,96], index: 1, kind: input, shape index: {}]
  %s2 = inlined_call_operand.vmem [shape: f32[1,96], index: 2, kind: input, shape index: {}]
  %s3 = inlined_call_operand.hbm [shape: bf16[32,32], index: 3, kind: input, shape index: {}]
  %s4 = inlined_call_operand.vmem [shape: f32[1,32], index: 4, kind: input, shape index: {}]
  %s5 = inlined_call_operand.hbm [shape: f32[16,32], index: 5, kind: output, shape index: {}]
  %s6 = sld [smem:[#allocation0]]
  $region42: #{tpu_custom_call.1} parent=0
    _
  %s8 = ssub.s32 1, %s6
  %s9 = scalar_select 0, %s8, %s6
  $region1: #{tpu_custom_call.1} parent=0
    #allocation2 [shape = 'u8[8192]{0}', space=vmem, size = 0x2000, scoped, tag = 'input window, operand 0, single buffered']
    #allocation3 [shape = 's32[1]{0}', space=sflag, size = 0x4, scoped, tag = 'scoped memory for tpu_custom_call.1']
    #allocation4 [shape = 's32[1]{0}', space=sflag, size = 0x4, scoped, tag = 'scoped memory for tpu_custom_call.1']
    #allocation5 [shape = 'u8[8192]{0}', space=vmem, size = 0x2000, scoped, tag = 'input window, operand 1, single buffered']
    #allocation6 [shape = 's32[1]{0}', space=sflag, size = 0x4, scoped, tag = 'scoped memory for tpu_custom_call.1']
    #allocation7 [shape = 'u8[8192]{0}', space=vmem, size = 0x2000, scoped, tag = 'input window, operand 3, single buffered']
    #allocation8 [shape = 'u8[8192]{0}', space=vmem, size = 0x2000, scoped, tag = 'output window, operand 0, single buffered']
    %10 = vsyncpa [#allocation3], 0
    %11 = vsyncpa [#allocation6], 0
    %12 = vsyncpa [#allocation4], 0
    // Predicated region
    $region2: #{tpu_custom_call.1} parent=1 // pred_check
      _
    $region3: #{tpu_custom_call.1} parent=1 // pred_check_branch
      %14 = sbr.rel (0) target = $region5
    $region4: #{tpu_custom_call.1} parent=1 // pred_region
      %16 = vsyncadd [#allocation3], 0
      %s17 = sshll.u32 %s0, 4
      %s18 = int_to_ptr.hbm [resolvable:$true] %s17
      %s19 = sshll.u32 [#allocation2], 4
      %s20 = int_to_ptr.vmem [resolvable:$true] %s19
      %25 = dma.hbm_to_vmem [thread:$0]  %s18, 256, %s20, [#allocation3], 128, 128, 8
    $region5: #{tpu_custom_call.1} parent=1 // pred_fallthru
      _
    // Predicated region
    $region6: #{tpu_custom_call.1} parent=1 // pred_check
      _
    $region7: #{tpu_custom_call.1} parent=1 // pred_check_branch
      %27 = sbr.rel (0) target = $region9
    $region8: #{tpu_custom_call.1} parent=1 // pred_region
      %29 = vsyncadd [#allocation6], 0
      %s30 = sshll.u32 %s1, 4
      %s31 = int_to_ptr.hbm [resolvable:$true] %s30
      %s32 = sshll.u32 [#allocation5], 4
      %s33 = int_to_ptr.vmem [resolvable:$true] %s32
      %38 = dma.hbm_to_vmem [thread:$0]  %s31, 256, %s33, [#allocation6], 64, 64, 4
    $region9: #{tpu_custom_call.1} parent=1 // pred_fallthru
      _
    // Predicated region
    $region10: #{tpu_custom_call.1} parent=1 // pred_check
      _
    $region11: #{tpu_custom_call.1} parent=1 // pred_check_branch
      %40 = sbr.rel (0) target = $region13
    $region12: #{tpu_custom_call.1} parent=1 // pred_region
      _
    $region13: #{tpu_custom_call.1} parent=1 // pred_fallthru
      _
    // Predicated region
    $region14: #{tpu_custom_call.1} parent=1 // pred_check
      _
    $region15: #{tpu_custom_call.1} parent=1 // pred_check_branch
      %42 = sbr.rel (0) target = $region17
    $region16: #{tpu_custom_call.1} parent=1 // pred_region
      %44 = vsyncadd [#allocation6], 0
      %s45 = sshll.u32 %s3, 4
      %s46 = int_to_ptr.hbm [resolvable:$true] %s45
      %s47 = sshll.u32 [#allocation7], 4
      %s48 = int_to_ptr.vmem [resolvable:$true] %s47
      %53 = dma.hbm_to_vmem [thread:$0]  %s46, 256, %s48, [#allocation6], 64, 64, 4
    $region17: #{tpu_custom_call.1} parent=1 // pred_fallthru
      _
    // Predicated region
    $region18: #{tpu_custom_call.1} parent=1 // pred_check
      _
    $region19: #{tpu_custom_call.1} parent=1 // pred_check_branch
      %55 = sbr.rel (0) target = $region21
    $region20: #{tpu_custom_call.1} parent=1 // pred_region
      _
    $region21: #{tpu_custom_call.1} parent=1 // pred_fallthru
      _
    // Predicated region
    $region22: #{tpu_custom_call.1} parent=1 // pred_check
      _
    $region23: #{tpu_custom_call.1} parent=1 // pred_check_branch
      %57 = sbr.rel (0) target = $region25
    $region24: #{tpu_custom_call.1} parent=1 // pred_region
      %59 = dma.done [#allocation3], 256
    $region25: #{tpu_custom_call.1} parent=1 // pred_fallthru
      _
    // Predicated region
    $region26: #{tpu_custom_call.1} parent=1 // pred_check
      _
    $region27: #{tpu_custom_call.1} parent=1 // pred_check_branch
      %61 = sbr.rel (0) target = $region29
    $region28: #{tpu_custom_call.1} parent=1 // pred_region
      %63 = dma.done [#allocation6], 256
    $region29: #{tpu_custom_call.1} parent=1 // pred_fallthru
      _
    // Predicated region
    $region30: #{tpu_custom_call.1} parent=1 // pred_check
      _
    $region31: #{tpu_custom_call.1} parent=1 // pred_check_branch
      %65 = sbr.rel (0) target = $region33
    $region32: #{tpu_custom_call.1} parent=1 // pred_region
      %67 = dma.done [#allocation6], 256
    $region33: #{tpu_custom_call.1} parent=1 // pred_fallthru
      _
    %v69 = vld [vmem:[#allocation2] sm:$0xff]
    %v70 = vld [vmem:[#allocation2 + $0x8] sm:$0xff]
    %v71 = vpack.c.bf16 %v70, %v69
    %v72 = vld [vmem:[#allocation5] sm:$0xf]
    %v73 = vld [vmem:[#allocation5 + $0x4] sm:$0xf]
    %v74 = vld [vmem:[#allocation5 + $0x8] sm:$0xf]
    %v75 = vld [vmem:[#allocation5 + $0xc] sm:$0xf]
    %v76 = vld [vmem:[%s2] sm:$0x1]
    %v78 = vperm.slane %v76, 0
    %v84 = vunpack.c.l.b16 %v72
    %v85 = vunpack.c.l.b16 %v73
    %v86 = vunpack.c.l.b16 %v74
    %v87 = vunpack.c.l.b16 %v75
    %v88 = vpack.c.b16 %v85, %v84
    %v89 = vpack.c.b16 %v87, %v86
    %vm92 = vcmask 261120
    %v94 = vsel %vm92, %v71, 0
    %96 = vmatpush.bf16.msra.mxu0 0
    %97 = vmatpush.bf16.msra.mxu0 0
    %98 = vmatpush.bf16.msra.mxu0 0
    %99 = vmatpush.bf16.msra.mxu0 0
    %100 = vmatpush.bf16.msra.mxu0 0
    %101 = vmatpush.bf16.msra.mxu0 0
    %102 = vmatpush.bf16.msra.mxu0 %v89
    %103 = vmatpush.bf16.msra.mxu0 %v88
    %104 = vmatmul.bf16.gmra.mxu0 %v94
    %v105 = vpop.f32.mrf.mxu0
    %v106 = vadd.f32 %v78, %v105
    %v107 = vpop.f32.mrf.mxu0
    %v108 = vadd.f32 %v78, %v107
    %109 = vdwg.mxu0
    %112 = vrot.lane.b32.xlu0 %v106, 120
    %v113 = vpop.permute.xlu0 %112
    %114 = vrot.lane.b32.xlu0 %v108, 120
    %v115 = vpop.permute.xlu0 %114
    %118 = vrot.lane.b32.xlu0 %v106, 112
    %v119 = vpop.permute.xlu0 %118
    %120 = vrot.lane.b32.xlu0 %v108, 112
    %v121 = vpop.permute.xlu0 %120
    %124 = vrot.lane.b32.xlu0 %v106, 104
    %v125 = vpop.permute.xlu0 %124
    %126 = vrot.lane.b32.xlu0 %v108, 104
    %v127 = vpop.permute.xlu0 %126
    %v130 = vrot.slane %v119, 4
    %vm131 = vcmask 1047556
    %v132 = vsel %vm131, %v130, %v106
    %v133 = vrot.slane %v106, 4
    %v134 = vsel %vm131, %v119, %v133
    %v136 = vunpack.c.l.s4 1983009808
    %v137 = vunpack.c.0.s8 %v136
    %v138 = vperm.slane %v132, %v137
    %v140 = vunpack.c.l.s4 1983009808
    %v141 = vunpack.c.0.s8 %v140
    %v142 = vperm.slane %v134, %v141
    %v143 = vrot.slane %v125, 4
    %v144 = vsel %vm131, %v143, %v113
    %v145 = vrot.slane %v113, 4
    %v146 = vsel %vm131, %v125, %v145
    %v148 = vunpack.c.l.s4 1983009808
    %v149 = vunpack.c.0.s8 %v148
    %v150 = vperm.slane %v144, %v149
    %v152 = vunpack.c.l.s4 1983009808
    %v153 = vunpack.c.0.s8 %v152
    %v154 = vperm.slane %v146, %v153
    %v155 = vrot.slane %v150, 4
    %v156 = vsel %vm131, %v155, %v138
    %v157 = vrot.slane %v138, 4
    %v158 = vsel %vm131, %v150, %v157
    %v160 = vunpack.c.l.s4 1934713408
    %v161 = vunpack.c.0.s8 %v160
    %v162 = vperm.slane %v156, %v161
    %v164 = vunpack.c.l.s4 1934713408
    %v165 = vunpack.c.0.s8 %v164
    %v166 = vperm.slane %v158, %v165
    %v167 = vrot.slane %v154, 4
    %v168 = vsel %vm131, %v167, %v142
    %v169 = vrot.slane %v142, 4
    %v170 = vsel %vm131, %v154, %v169
    %v172 = vunpack.c.l.s4 1934713408
    %v173 = vunpack.c.0.s8 %v172
    %v174 = vperm.slane %v168, %v173
    %v176 = vunpack.c.l.s4 1934713408
    %v177 = vunpack.c.0.s8 %v176
    %v178 = vperm.slane %v170, %v177
    %v179 = vrot.slane %v162, 4
    %v180 = vsel %vm131, 0.0, %v179
    %v181 = vrot.slane %v166, 4
    %v182 = vsel %vm131, 0.0, %v181
    %v183 = vrot.slane %v174, 4
    %v184 = vsel %vm131, 0.0, %v183
    %v185 = vrot.slane %v178, 4
    %v186 = vsel %vm131, 0.0, %v185
    %v187 = vrot.slane %v121, 4
    %v188 = vsel %vm131, %v187, %v108
    %v189 = vrot.slane %v108, 4
    %v190 = vsel %vm131, %v121, %v189
    %v192 = vunpack.c.l.s4 1983009808
    %v193 = vunpack.c.0.s8 %v192
    %v194 = vperm.slane %v188, %v193
    %v196 = vunpack.c.l.s4 1983009808
    %v197 = vunpack.c.0.s8 %v196
    %v198 = vperm.slane %v190, %v197
    %v199 = vrot.slane %v127, 4
    %v200 = vsel %vm131, %v199, %v115
    %v201 = vrot.slane %v115, 4
    %v202 = vsel %vm131, %v127, %v201
    %v204 = vunpack.c.l.s4 1983009808
    %v205 = vunpack.c.0.s8 %v204
    %v206 = vperm.slane %v200, %v205
    %v208 = vunpack.c.l.s4 1983009808
    %v209 = vunpack.c.0.s8 %v208
    %v210 = vperm.slane %v202, %v209
    %v211 = vrot.slane %v206, 4
    %v212 = vsel %vm131, %v211, %v194
    %v213 = vrot.slane %v194, 4
    %v214 = vsel %vm131, %v206, %v213
    %v216 = vunpack.c.l.s4 1934713408
    %v217 = vunpack.c.0.s8 %v216
    %v218 = vperm.slane %v212, %v217
    %v220 = vunpack.c.l.s4 1934713408
    %v221 = vunpack.c.0.s8 %v220
    %v222 = vperm.slane %v214, %v221
    %v223 = vrot.slane %v210, 4
    %v224 = vsel %vm131, %v223, %v198
    %v225 = vrot.slane %v198, 4
    %v226 = vsel %vm131, %v210, %v225
    %v228 = vunpack.c.l.s4 1934713408
    %v229 = vunpack.c.0.s8 %v228
    %v230 = vperm.slane %v224, %v229
    %v232 = vunpack.c.l.s4 1934713408
    %v233 = vunpack.c.0.s8 %v232
    %v234 = vperm.slane %v226, %v233
    %v235 = vrot.slane %v218, 4
    %v236 = vsel %vm131, 0.0, %v235
    %v237 = vrot.slane %v222, 4
    %v238 = vsel %vm131, 0.0, %v237
    %v239 = vrot.slane %v230, 4
    %v240 = vsel %vm131, 0.0, %v239
    %v241 = vrot.slane %v234, 4
    %v242 = vsel %vm131, 0.0, %v241
    %v243 = vsel %vm131, %v181, %v162
    %v245 = vunpack.c.l.s4 1983009808
    %v246 = vunpack.c.0.s8 %v245
    %v247 = vperm.slane %v243, %v246
    %v248 = vrot.slane %v182, 4
    %v249 = vsel %vm131, %v248, %v180
    %v251 = vunpack.c.l.s4 1983009808
    %v252 = vunpack.c.0.s8 %v251
    %v253 = vperm.slane %v249, %v252
    %v254 = vsel %vm131, %v185, %v174
    %v256 = vunpack.c.l.s4 1983009808
    %v257 = vunpack.c.0.s8 %v256
    %v258 = vperm.slane %v254, %v257
    %v259 = vrot.slane %v186, 4
    %v260 = vsel %vm131, %v259, %v184
    %v262 = vunpack.c.l.s4 1983009808
    %v263 = vunpack.c.0.s8 %v262
    %v264 = vperm.slane %v260, %v263
    %v265 = vrot.slane %v253, 4
    %v266 = vsel %vm131, %v265, %v247
    %v267 = vrot.slane %v247, 4
    %v268 = vsel %vm131, %v253, %v267
    %v270 = vunpack.c.l.s4 1934713408
    %v271 = vunpack.c.0.s8 %v270
    %v272 = vperm.slane %v266, %v271
    %v274 = vunpack.c.l.s4 1934713408
    %v275 = vunpack.c.0.s8 %v274
    %v276 = vperm.slane %v268, %v275
    %v277 = vrot.slane %v264, 4
    %v278 = vsel %vm131, %v277, %v258
    %v279 = vrot.slane %v258, 4
    %v280 = vsel %vm131, %v264, %v279
    %v282 = vunpack.c.l.s4 1934713408
    %v283 = vunpack.c.0.s8 %v282
    %v284 = vperm.slane %v278, %v283
    %v286 = vunpack.c.l.s4 1934713408
    %v287 = vunpack.c.0.s8 %v286
    %v288 = vperm.slane %v280, %v287
    %v289 = vrot.slane %v284, 4
    %v290 = vsel %vm131, %v289, %v272
    %v291 = vrot.slane %v272, 4
    %v292 = vsel %vm131, %v284, %v291
    %v293 = vrot.slane %v288, 4
    %v294 = vsel %vm131, %v293, %v276
    %v295 = vrot.slane %v276, 4
    %v296 = vsel %vm131, %v288, %v295
    %v297 = vsel %vm131, %v237, %v218
    %v299 = vunpack.c.l.s4 1983009808
    %v300 = vunpack.c.0.s8 %v299
    %v301 = vperm.slane %v297, %v300
    %v302 = vrot.slane %v238, 4
    %v303 = vsel %vm131, %v302, %v236
    %v305 = vunpack.c.l.s4 1983009808
    %v306 = vunpack.c.0.s8 %v305
    %v307 = vperm.slane %v303, %v306
    %v308 = vsel %vm131, %v241, %v230
    %v310 = vunpack.c.l.s4 1983009808
    %v311 = vunpack.c.0.s8 %v310
    %v312 = vperm.slane %v308, %v311
    %v313 = vrot.slane %v242, 4
    %v314 = vsel %vm131, %v313, %v240
    %v316 = vunpack.c.l.s4 1983009808
    %v317 = vunpack.c.0.s8 %v316
    %v318 = vperm.slane %v314, %v317
    %v319 = vrot.slane %v307, 4
    %v320 = vsel %vm131, %v319, %v301
    %v321 = vrot.slane %v301, 4
    %v322 = vsel %vm131, %v307, %v321
    %v324 = vunpack.c.l.s4 1934713408
    %v325 = vunpack.c.0.s8 %v324
    %v326 = vperm.slane %v320, %v325
    %v328 = vunpack.c.l.s4 1934713408
    %v329 = vunpack.c.0.s8 %v328
    %v330 = vperm.slane %v322, %v329
    %v331 = vrot.slane %v318, 4
    %v332 = vsel %vm131, %v331, %v312
    %v333 = vrot.slane %v312, 4
    %v334 = vsel %vm131, %v318, %v333
    %v336 = vunpack.c.l.s4 1934713408
    %v337 = vunpack.c.0.s8 %v336
    %v338 = vperm.slane %v332, %v337
    %v340 = vunpack.c.l.s4 1934713408
    %v341 = vunpack.c.0.s8 %v340
    %v342 = vperm.slane %v334, %v341
    %v343 = vrot.slane %v338, 4
    %v344 = vsel %vm131, %v343, %v326
    %v345 = vrot.slane %v326, 4
    %v346 = vsel %vm131, %v338, %v345
    %v347 = vrot.slane %v342, 4
    %v348 = vsel %vm131, %v347, %v330
    %v349 = vrot.slane %v330, 4
    %v350 = vsel %vm131, %v342, %v349
    %v351 = vpack.c.bf16 %v290, %v290
    %v352 = vpack.c.bf16 %v292, %v292
    %v353 = vpack.c.bf16 %v294, %v294
    %v354 = vpack.c.bf16 %v296, %v296
    %v355 = vpack.c.bf16 %v344, %v344
    %v356 = vpack.c.bf16 %v346, %v346
    %v357 = vpack.c.bf16 %v348, %v348
    %v358 = vpack.c.bf16 %v350, %v350
    %359 = vrot.lane.b32.xlu0 %v106, 96
    %v360 = vpop.permute.xlu0 %359
    %361 = vrot.lane.b32.xlu0 %v108, 96
    %v362 = vpop.permute.xlu0 %361
    %363 = vrot.lane.b32.xlu0 %v113, 96
    %v364 = vpop.permute.xlu0 %363
    %365 = vrot.lane.b32.xlu0 %v115, 96
    %v366 = vpop.permute.xlu0 %365
    %367 = vrot.lane.b32.xlu0 %v119, 96
    %v368 = vpop.permute.xlu0 %367
    %369 = vrot.lane.b32.xlu0 %v121, 96
    %v370 = vpop.permute.xlu0 %369
    %371 = vrot.lane.b32.xlu0 %v125, 96
    %v372 = vpop.permute.xlu0 %371
    %373 = vrot.lane.b32.xlu0 %v127, 96
    %v374 = vpop.permute.xlu0 %373
    %v383 = vrot.slane %v368, 4
    %v384 = vsel %vm131, %v383, %v360
    %v385 = vrot.slane %v360, 4
    %v386 = vsel %vm131, %v368, %v385
    %v388 = vunpack.c.l.s4 1983009808
    %v389 = vunpack.c.0.s8 %v388
    %v390 = vperm.slane %v384, %v389
    %v392 = vunpack.c.l.s4 1983009808
    %v393 = vunpack.c.0.s8 %v392
    %v394 = vperm.slane %v386, %v393
    %v395 = vrot.slane %v372, 4
    %v396 = vsel %vm131, %v395, %v364
    %v397 = vrot.slane %v364, 4
    %v398 = vsel %vm131, %v372, %v397
    %v400 = vunpack.c.l.s4 1983009808
    %v401 = vunpack.c.0.s8 %v400
    %v402 = vperm.slane %v396, %v401
    %v404 = vunpack.c.l.s4 1983009808
    %v405 = vunpack.c.0.s8 %v404
    %v406 = vperm.slane %v398, %v405
    %v407 = vrot.slane %v402, 4
    %v408 = vsel %vm131, %v407, %v390
    %v409 = vrot.slane %v390, 4
    %v410 = vsel %vm131, %v402, %v409
    %v412 = vunpack.c.l.s4 1934713408
    %v413 = vunpack.c.0.s8 %v412
    %v414 = vperm.slane %v408, %v413
    %v416 = vunpack.c.l.s4 1934713408
    %v417 = vunpack.c.0.s8 %v416
    %v418 = vperm.slane %v410, %v417
    %v419 = vrot.slane %v406, 4
    %v420 = vsel %vm131, %v419, %v394
    %v421 = vrot.slane %v394, 4
    %v422 = vsel %vm131, %v406, %v421
    %v424 = vunpack.c.l.s4 1934713408
    %v425 = vunpack.c.0.s8 %v424
    %v426 = vperm.slane %v420, %v425
    %v428 = vunpack.c.l.s4 1934713408
    %v429 = vunpack.c.0.s8 %v428
    %v430 = vperm.slane %v422, %v429
    %v431 = vrot.slane %v414, 4
    %v432 = vsel %vm131, 0.0, %v431
    %v433 = vrot.slane %v418, 4
    %v434 = vsel %vm131, 0.0, %v433
    %v435 = vrot.slane %v426, 4
    %v436 = vsel %vm131, 0.0, %v435
    %v437 = vrot.slane %v430, 4
    %v438 = vsel %vm131, 0.0, %v437
    %v439 = vrot.slane %v370, 4
    %v440 = vsel %vm131, %v439, %v362
    %v441 = vrot.slane %v362, 4
    %v442 = vsel %vm131, %v370, %v441
    %v444 = vunpack.c.l.s4 1983009808
    %v445 = vunpack.c.0.s8 %v444
    %v446 = vperm.slane %v440, %v445
    %v448 = vunpack.c.l.s4 1983009808
    %v449 = vunpack.c.0.s8 %v448
    %v450 = vperm.slane %v442, %v449
    %v451 = vrot.slane %v374, 4
    %v452 = vsel %vm131, %v451, %v366
    %v453 = vrot.slane %v366, 4
    %v454 = vsel %vm131, %v374, %v453
    %v456 = vunpack.c.l.s4 1983009808
    %v457 = vunpack.c.0.s8 %v456
    %v458 = vperm.slane %v452, %v457
    %v460 = vunpack.c.l.s4 1983009808
    %v461 = vunpack.c.0.s8 %v460
    %v462 = vperm.slane %v454, %v461
    %v463 = vrot.slane %v458, 4
    %v464 = vsel %vm131, %v463, %v446
    %v465 = vrot.slane %v446, 4
    %v466 = vsel %vm131, %v458, %v465
    %v468 = vunpack.c.l.s4 1934713408
    %v469 = vunpack.c.0.s8 %v468
    %v470 = vperm.slane %v464, %v469
    %v472 = vunpack.c.l.s4 1934713408
    %v473 = vunpack.c.0.s8 %v472
    %v474 = vperm.slane %v466, %v473
    %v475 = vrot.slane %v462, 4
    %v476 = vsel %vm131, %v475, %v450
    %v477 = vrot.slane %v450, 4
    %v478 = vsel %vm131, %v462, %v477
    %v480 = vunpack.c.l.s4 1934713408
    %v481 = vunpack.c.0.s8 %v480
    %v482 = vperm.slane %v476, %v481
    %v484 = vunpack.c.l.s4 1934713408
    %v485 = vunpack.c.0.s8 %v484
    %v486 = vperm.slane %v478, %v485
    %v487 = vrot.slane %v470, 4
    %v488 = vsel %vm131, 0.0, %v487
    %v489 = vrot.slane %v474, 4
    %v490 = vsel %vm131, 0.0, %v489
    %v491 = vrot.slane %v482, 4
    %v492 = vsel %vm131, 0.0, %v491
    %v493 = vrot.slane %v486, 4
    %v494 = vsel %vm131, 0.0, %v493
    %v495 = vsel %vm131, %v433, %v414
    %v497 = vunpack.c.l.s4 1983009808
    %v498 = vunpack.c.0.s8 %v497
    %v499 = vperm.slane %v495, %v498
    %v500 = vrot.slane %v434, 4
    %v501 = vsel %vm131, %v500, %v432
    %v503 = vunpack.c.l.s4 1983009808
    %v504 = vunpack.c.0.s8 %v503
    %v505 = vperm.slane %v501, %v504
    %v506 = vsel %vm131, %v437, %v426
    %v508 = vunpack.c.l.s4 1983009808
    %v509 = vunpack.c.0.s8 %v508
    %v510 = vperm.slane %v506, %v509
    %v511 = vrot.slane %v438, 4
    %v512 = vsel %vm131, %v511, %v436
    %v514 = vunpack.c.l.s4 1983009808
    %v515 = vunpack.c.0.s8 %v514
    %v516 = vperm.slane %v512, %v515
    %v517 = vrot.slane %v505, 4
    %v518 = vsel %vm131, %v517, %v499
    %v519 = vrot.slane %v499, 4
    %v520 = vsel %vm131, %v505, %v519
    %v522 = vunpack.c.l.s4 1934713408
    %v523 = vunpack.c.0.s8 %v522
    %v524 = vperm.slane %v518, %v523
    %v526 = vunpack.c.l.s4 1934713408
    %v527 = vunpack.c.0.s8 %v526
    %v528 = vperm.slane %v520, %v527
    %v529 = vrot.slane %v516, 4
    %v530 = vsel %vm131, %v529, %v510
    %v531 = vrot.slane %v510, 4
    %v532 = vsel %vm131, %v516, %v531
    %v534 = vunpack.c.l.s4 1934713408
    %v535 = vunpack.c.0.s8 %v534
    %v536 = vperm.slane %v530, %v535
    %v538 = vunpack.c.l.s4 1934713408
    %v539 = vunpack.c.0.s8 %v538
    %v540 = vperm.slane %v532, %v539
    %v541 = vrot.slane %v536, 4
    %v542 = vsel %vm131, %v541, %v524
    %v543 = vrot.slane %v524, 4
    %v544 = vsel %vm131, %v536, %v543
    %v545 = vrot.slane %v540, 4
    %v546 = vsel %vm131, %v545, %v528
    %v547 = vrot.slane %v528, 4
    %v548 = vsel %vm131, %v540, %v547
    %v549 = vsel %vm131, %v489, %v470
    %v551 = vunpack.c.l.s4 1983009808
    %v552 = vunpack.c.0.s8 %v551
    %v553 = vperm.slane %v549, %v552
    %v554 = vrot.slane %v490, 4
    %v555 = vsel %vm131, %v554, %v488
    %v557 = vunpack.c.l.s4 1983009808
    %v558 = vunpack.c.0.s8 %v557
    %v559 = vperm.slane %v555, %v558
    %v560 = vsel %vm131, %v493, %v482
    %v562 = vunpack.c.l.s4 1983009808
    %v563 = vunpack.c.0.s8 %v562
    %v564 = vperm.slane %v560, %v563
    %v565 = vrot.slane %v494, 4
    %v566 = vsel %vm131, %v565, %v492
    %v568 = vunpack.c.l.s4 1983009808
    %v569 = vunpack.c.0.s8 %v568
    %v570 = vperm.slane %v566, %v569
    %v571 = vrot.slane %v559, 4
    %v572 = vsel %vm131, %v571, %v553
    %v573 = vrot.slane %v553, 4
    %v574 = vsel %vm131, %v559, %v573
    %v576 = vunpack.c.l.s4 1934713408
    %v577 = vunpack.c.0.s8 %v576
    %v578 = vperm.slane %v572, %v577
    %v580 = vunpack.c.l.s4 1934713408
    %v581 = vunpack.c.0.s8 %v580
    %v582 = vperm.slane %v574, %v581
    %v583 = vrot.slane %v570, 4
    %v584 = vsel %vm131, %v583, %v564
    %v585 = vrot.slane %v564, 4
    %v586 = vsel %vm131, %v570, %v585
    %v588 = vunpack.c.l.s4 1934713408
    %v589 = vunpack.c.0.s8 %v588
    %v590 = vperm.slane %v584, %v589
    %v592 = vunpack.c.l.s4 1934713408
    %v593 = vunpack.c.0.s8 %v592
    %v594 = vperm.slane %v586, %v593
    %v595 = vrot.slane %v590, 4
    %v596 = vsel %vm131, %v595, %v578
    %v597 = vrot.slane %v578, 4
    %v598 = vsel %vm131, %v590, %v597
    %v599 = vrot.slane %v594, 4
    %v600 = vsel %vm131, %v599, %v582
    %v601 = vrot.slane %v582, 4
    %v602 = vsel %vm131, %v594, %v601
    %v603 = vpack.c.bf16 %v542, %v542
    %v604 = vpack.c.bf16 %v544, %v544
    %v605 = vpack.c.bf16 %v546, %v546
    %v606 = vpack.c.bf16 %v548, %v548
    %v607 = vpack.c.bf16 %v596, %v596
    %v608 = vpack.c.bf16 %v598, %v598
    %v609 = vpack.c.bf16 %v600, %v600
    %v610 = vpack.c.bf16 %v602, %v602
    %611 = vrot.lane.b32.xlu0 %v106, 64
    %v612 = vpop.permute.xlu0 %611
    %613 = vrot.lane.b32.xlu0 %v108, 64
    %v614 = vpop.permute.xlu0 %613
    %615 = vrot.lane.b32.xlu0 %v113, 64
    %v616 = vpop.permute.xlu0 %615
    %617 = vrot.lane.b32.xlu0 %v115, 64
    %v618 = vpop.permute.xlu0 %617
    %619 = vrot.lane.b32.xlu0 %v119, 64
    %v620 = vpop.permute.xlu0 %619
    %621 = vrot.lane.b32.xlu0 %v121, 64
    %v622 = vpop.permute.xlu0 %621
    %623 = vrot.lane.b32.xlu0 %v125, 64
    %v624 = vpop.permute.xlu0 %623
    %625 = vrot.lane.b32.xlu0 %v127, 64
    %v626 = vpop.permute.xlu0 %625
    %v635 = vrot.slane %v620, 4
    %v636 = vsel %vm131, %v635, %v612
    %v637 = vrot.slane %v612, 4
    %v638 = vsel %vm131, %v620, %v637
    %v640 = vunpack.c.l.s4 1983009808
    %v641 = vunpack.c.0.s8 %v640
    %v642 = vperm.slane %v636, %v641
    %v644 = vunpack.c.l.s4 1983009808
    %v645 = vunpack.c.0.s8 %v644
    %v646 = vperm.slane %v638, %v645
    %v647 = vrot.slane %v624, 4
    %v648 = vsel %vm131, %v647, %v616
    %v649 = vrot.slane %v616, 4
    %v650 = vsel %vm131, %v624, %v649
    %v652 = vunpack.c.l.s4 1983009808
    %v653 = vunpack.c.0.s8 %v652
    %v654 = vperm.slane %v648, %v653
    %v656 = vunpack.c.l.s4 1983009808
    %v657 = vunpack.c.0.s8 %v656
    %v658 = vperm.slane %v650, %v657
    %v659 = vrot.slane %v654, 4
    %v660 = vsel %vm131, %v659, %v642
    %v661 = vrot.slane %v642, 4
    %v662 = vsel %vm131, %v654, %v661
    %v664 = vunpack.c.l.s4 1934713408
    %v665 = vunpack.c.0.s8 %v664
    %v666 = vperm.slane %v660, %v665
    %v668 = vunpack.c.l.s4 1934713408
    %v669 = vunpack.c.0.s8 %v668
    %v670 = vperm.slane %v662, %v669
    %v671 = vrot.slane %v658, 4
    %v672 = vsel %vm131, %v671, %v646
    %v673 = vrot.slane %v646, 4
    %v674 = vsel %vm131, %v658, %v673
    %v676 = vunpack.c.l.s4 1934713408
    %v677 = vunpack.c.0.s8 %v676
    %v678 = vperm.slane %v672, %v677
    %v680 = vunpack.c.l.s4 1934713408
    %v681 = vunpack.c.0.s8 %v680
    %v682 = vperm.slane %v674, %v681
    %v683 = vrot.slane %v666, 4
    %v684 = vsel %vm131, 0.0, %v683
    %v685 = vrot.slane %v670, 4
    %v686 = vsel %vm131, 0.0, %v685
    %v687 = vrot.slane %v678, 4
    %v688 = vsel %vm131, 0.0, %v687
    %v689 = vrot.slane %v682, 4
    %v690 = vsel %vm131, 0.0, %v689
    %v691 = vrot.slane %v622, 4
    %v692 = vsel %vm131, %v691, %v614
    %v693 = vrot.slane %v614, 4
    %v694 = vsel %vm131, %v622, %v693
    %v696 = vunpack.c.l.s4 1983009808
    %v697 = vunpack.c.0.s8 %v696
    %v698 = vperm.slane %v692, %v697
    %v700 = vunpack.c.l.s4 1983009808
    %v701 = vunpack.c.0.s8 %v700
    %v702 = vperm.slane %v694, %v701
    %v703 = vrot.slane %v626, 4
    %v704 = vsel %vm131, %v703, %v618
    %v705 = vrot.slane %v618, 4
    %v706 = vsel %vm131, %v626, %v705
    %v708 = vunpack.c.l.s4 1983009808
    %v709 = vunpack.c.0.s8 %v708
    %v710 = vperm.slane %v704, %v709
    %v712 = vunpack.c.l.s4 1983009808
    %v713 = vunpack.c.0.s8 %v712
    %v714 = vperm.slane %v706, %v713
    %v715 = vrot.slane %v710, 4
    %v716 = vsel %vm131, %v715, %v698
    %v717 = vrot.slane %v698, 4
    %v718 = vsel %vm131, %v710, %v717
    %v720 = vunpack.c.l.s4 1934713408
    %v721 = vunpack.c.0.s8 %v720
    %v722 = vperm.slane %v716, %v721
    %v724 = vunpack.c.l.s4 1934713408
    %v725 = vunpack.c.0.s8 %v724
    %v726 = vperm.slane %v718, %v725
    %v727 = vrot.slane %v714, 4
    %v728 = vsel %vm131, %v727, %v702
    %v729 = vrot.slane %v702, 4
    %v730 = vsel %vm131, %v714, %v729
    %v732 = vunpack.c.l.s4 1934713408
    %v733 = vunpack.c.0.s8 %v732
    %v734 = vperm.slane %v728, %v733
    %v736 = vunpack.c.l.s4 1934713408
    %v737 = vunpack.c.0.s8 %v736
    %v738 = vperm.slane %v730, %v737
    %v739 = vrot.slane %v722, 4
    %v740 = vsel %vm131, 0.0, %v739
    %v741 = vrot.slane %v726, 4
    %v742 = vsel %vm131, 0.0, %v741
    %v743 = vrot.slane %v734, 4
    %v744 = vsel %vm131, 0.0, %v743
    %v745 = vrot.slane %v738, 4
    %v746 = vsel %vm131, 0.0, %v745
    %v747 = vsel %vm131, %v685, %v666
    %v749 = vunpack.c.l.s4 1983009808
    %v750 = vunpack.c.0.s8 %v749
    %v751 = vperm.slane %v747, %v750
    %v752 = vrot.slane %v686, 4
    %v753 = vsel %vm131, %v752, %v684
    %v755 = vunpack.c.l.s4 1983009808
    %v756 = vunpack.c.0.s8 %v755
    %v757 = vperm.slane %v753, %v756
    %v758 = vsel %vm131, %v689, %v678
    %v760 = vunpack.c.l.s4 1983009808
    %v761 = vunpack.c.0.s8 %v760
    %v762 = vperm.slane %v758, %v761
    %v763 = vrot.slane %v690, 4
    %v764 = vsel %vm131, %v763, %v688
    %v766 = vunpack.c.l.s4 1983009808
    %v767 = vunpack.c.0.s8 %v766
    %v768 = vperm.slane %v764, %v767
    %v769 = vrot.slane %v757, 4
    %v770 = vsel %vm131, %v769, %v751
    %v771 = vrot.slane %v751, 4
    %v772 = vsel %vm131, %v757, %v771
    %v774 = vunpack.c.l.s4 1934713408
    %v775 = vunpack.c.0.s8 %v774
    %v776 = vperm.slane %v770, %v775
    %v778 = vunpack.c.l.s4 1934713408
    %v779 = vunpack.c.0.s8 %v778
    %v780 = vperm.slane %v772, %v779
    %v781 = vrot.slane %v768, 4
    %v782 = vsel %vm131, %v781, %v762
    %v783 = vrot.slane %v762, 4
    %v784 = vsel %vm131, %v768, %v783
    %v786 = vunpack.c.l.s4 1934713408
    %v787 = vunpack.c.0.s8 %v786
    %v788 = vperm.slane %v782, %v787
    %v790 = vunpack.c.l.s4 1934713408
    %v791 = vunpack.c.0.s8 %v790
    %v792 = vperm.slane %v784, %v791
    %v793 = vrot.slane %v788, 4
    %v794 = vsel %vm131, %v793, %v776
    %v795 = vrot.slane %v776, 4
    %v796 = vsel %vm131, %v788, %v795
    %v797 = vrot.slane %v792, 4
    %v798 = vsel %vm131, %v797, %v780
    %v799 = vrot.slane %v780, 4
    %v800 = vsel %vm131, %v792, %v799
    %v801 = vsel %vm131, %v741, %v722
    %v803 = vunpack.c.l.s4 1983009808
    %v804 = vunpack.c.0.s8 %v803
    %v805 = vperm.slane %v801, %v804
    %v806 = vrot.slane %v742, 4
    %v807 = vsel %vm131, %v806, %v740
    %v809 = vunpack.c.l.s4 1983009808
    %v810 = vunpack.c.0.s8 %v809
    %v811 = vperm.slane %v807, %v810
    %v812 = vsel %vm131, %v745, %v734
    %v814 = vunpack.c.l.s4 1983009808
    %v815 = vunpack.c.0.s8 %v814
    %v816 = vperm.slane %v812, %v815
    %v817 = vrot.slane %v746, 4
    %v818 = vsel %vm131, %v817, %v744
    %v820 = vunpack.c.l.s4 1983009808
    %v821 = vunpack.c.0.s8 %v820
    %v822 = vperm.slane %v818, %v821
    %v823 = vrot.slane %v811, 4
    %v824 = vsel %vm131, %v823, %v805
    %v825 = vrot.slane %v805, 4
    %v826 = vsel %vm131, %v811, %v825
    %v828 = vunpack.c.l.s4 1934713408
    %v829 = vunpack.c.0.s8 %v828
    %v830 = vperm.slane %v824, %v829
    %v832 = vunpack.c.l.s4 1934713408
    %v833 = vunpack.c.0.s8 %v832
    %v834 = vperm.slane %v826, %v833
    %v835 = vrot.slane %v822, 4
    %v836 = vsel %vm131, %v835, %v816
    %v837 = vrot.slane %v816, 4
    %v838 = vsel %vm131, %v822, %v837
    %v840 = vunpack.c.l.s4 1934713408
    %v841 = vunpack.c.0.s8 %v840
    %v842 = vperm.slane %v836, %v841
    %v844 = vunpack.c.l.s4 1934713408
    %v845 = vunpack.c.0.s8 %v844
    %v846 = vperm.slane %v838, %v845
    %v847 = vrot.slane %v842, 4
    %v848 = vsel %vm131, %v847, %v830
    %v849 = vrot.slane %v830, 4
    %v850 = vsel %vm131, %v842, %v849
    %v851 = vrot.slane %v846, 4
    %v852 = vsel %vm131, %v851, %v834
    %v853 = vrot.slane %v834, 4
    %v854 = vsel %vm131, %v846, %v853
    %v855 = vpack.c.bf16 %v794, %v794
    %v856 = vpack.c.bf16 %v796, %v796
    %v857 = vpack.c.bf16 %v798, %v798
    %v858 = vpack.c.bf16 %v800, %v800
    %v859 = vpack.c.bf16 %v848, %v848
    %v860 = vpack.c.bf16 %v850, %v850
    %v861 = vpack.c.bf16 %v852, %v852
    %v862 = vpack.c.bf16 %v854, %v854
    %vm863 = vcmask 64512
    %v865 = vsel %vm863, %v351, 0
    %v868 = vsel %vm863, %v603, 0
    %870 = vmatpush.bf16.xpose.msra.mxu0 0
    %871 = vmatpush.bf16.xpose.msra.mxu0 0
    %872 = vmatpush.bf16.xpose.msra.mxu0 0
    %873 = vmatpush.bf16.xpose.msra.mxu0 0
    %874 = vmatpush.bf16.xpose.msra.mxu0 0
    %875 = vmatpush.bf16.xpose.msra.mxu0 0
    %876 = vmatpush.bf16.xpose.msra.mxu0 0
    %877 = vmatpush.bf16.xpose.msra.mxu0 %v868
    %878 = vmatmul.bf16.gmra.mxu0 %v865
    %v879 = vpop.f32.mrf.mxu0
    %v880 = vadd.f32 0.0, %v879
    %v881 = vpop.f32.mrf.mxu0
    %882 = vdwg.mxu0
    %v884 = vsel %vm863, %v352, 0
    %v887 = vsel %vm863, %v604, 0
    %889 = vmatpush.bf16.xpose.msra.mxu0 0
    %890 = vmatpush.bf16.xpose.msra.mxu0 0
    %891 = vmatpush.bf16.xpose.msra.mxu0 0
    %892 = vmatpush.bf16.xpose.msra.mxu0 0
    %893 = vmatpush.bf16.xpose.msra.mxu0 0
    %894 = vmatpush.bf16.xpose.msra.mxu0 0
    %895 = vmatpush.bf16.xpose.msra.mxu0 0
    %896 = vmatpush.bf16.xpose.msra.mxu0 %v887
    %897 = vmatmul.bf16.gmra.mxu0 %v884
    %v898 = vpop.f32.mrf.mxu0
    %v899 = vadd.f32 0.0, %v898
    %v900 = vpop.f32.mrf.mxu0
    %901 = vdwg.mxu0
    %v903 = vsel %vm863, %v353, 0
    %v906 = vsel %vm863, %v605, 0
    %908 = vmatpush.bf16.xpose.msra.mxu0 0
    %909 = vmatpush.bf16.xpose.msra.mxu0 0
    %910 = vmatpush.bf16.xpose.msra.mxu0 0
    %911 = vmatpush.bf16.xpose.msra.mxu0 0
    %912 = vmatpush.bf16.xpose.msra.mxu0 0
    %913 = vmatpush.bf16.xpose.msra.mxu0 0
    %914 = vmatpush.bf16.xpose.msra.mxu0 0
    %915 = vmatpush.bf16.xpose.msra.mxu0 %v906
    %916 = vmatmul.bf16.gmra.mxu0 %v903
    %v917 = vpop.f32.mrf.mxu0
    %v918 = vadd.f32 0.0, %v917
    %v919 = vpop.f32.mrf.mxu0
    %920 = vdwg.mxu0
    %v922 = vsel %vm863, %v354, 0
    %v925 = vsel %vm863, %v606, 0
    %927 = vmatpush.bf16.xpose.msra.mxu0 0
    %928 = vmatpush.bf16.xpose.msra.mxu0 0
    %929 = vmatpush.bf16.xpose.msra.mxu0 0
    %930 = vmatpush.bf16.xpose.msra.mxu0 0
    %931 = vmatpush.bf16.xpose.msra.mxu0 0
    %932 = vmatpush.bf16.xpose.msra.mxu0 0
    %933 = vmatpush.bf16.xpose.msra.mxu0 0
    %934 = vmatpush.bf16.xpose.msra.mxu0 %v925
    %935 = vmatmul.bf16.gmra.mxu0 %v922
    %v936 = vpop.f32.mrf.mxu0
    %v937 = vadd.f32 0.0, %v936
    %v938 = vpop.f32.mrf.mxu0
    %939 = vdwg.mxu0
    %v941 = vsel %vm863, %v355, 0
    %v944 = vsel %vm863, %v607, 0
    %946 = vmatpush.bf16.xpose.msra.mxu0 0
    %947 = vmatpush.bf16.xpose.msra.mxu0 0
    %948 = vmatpush.bf16.xpose.msra.mxu0 0
    %949 = vmatpush.bf16.xpose.msra.mxu0 0
    %950 = vmatpush.bf16.xpose.msra.mxu0 0
    %951 = vmatpush.bf16.xpose.msra.mxu0 0
    %952 = vmatpush.bf16.xpose.msra.mxu0 0
    %953 = vmatpush.bf16.xpose.msra.mxu0 %v944
    %954 = vmatmul.bf16.gmra.mxu0 %v941
    %v955 = vpop.f32.mrf.mxu0
    %v956 = vadd.f32 0.0, %v955
    %v957 = vpop.f32.mrf.mxu0
    %958 = vdwg.mxu0
    %v960 = vsel %vm863, %v356, 0
    %v963 = vsel %vm863, %v608, 0
    %965 = vmatpush.bf16.xpose.msra.mxu0 0
    %966 = vmatpush.bf16.xpose.msra.mxu0 0
    %967 = vmatpush.bf16.xpose.msra.mxu0 0
    %968 = vmatpush.bf16.xpose.msra.mxu0 0
    %969 = vmatpush.bf16.xpose.msra.mxu0 0
    %970 = vmatpush.bf16.xpose.msra.mxu0 0
    %971 = vmatpush.bf16.xpose.msra.mxu0 0
    %972 = vmatpush.bf16.xpose.msra.mxu0 %v963
    %973 = vmatmul.bf16.gmra.mxu0 %v960
    %v974 = vpop.f32.mrf.mxu0
    %v975 = vadd.f32 0.0, %v974
    %v976 = vpop.f32.mrf.mxu0
    %977 = vdwg.mxu0
    %v979 = vsel %vm863, %v357, 0
    %v982 = vsel %vm863, %v609, 0
    %984 = vmatpush.bf16.xpose.msra.mxu0 0
    %985 = vmatpush.bf16.xpose.msra.mxu0 0
    %986 = vmatpush.bf16.xpose.msra.mxu0 0
    %987 = vmatpush.bf16.xpose.msra.mxu0 0
    %988 = vmatpush.bf16.xpose.msra.mxu0 0
    %989 = vmatpush.bf16.xpose.msra.mxu0 0
    %990 = vmatpush.bf16.xpose.msra.mxu0 0
    %991 = vmatpush.bf16.xpose.msra.mxu0 %v982
    %992 = vmatmul.bf16.gmra.mxu0 %v979
    %v993 = vpop.f32.mrf.mxu0
    %v994 = vadd.f32 0.0, %v993
    %v995 = vpop.f32.mrf.mxu0
    %996 = vdwg.mxu0
    %v998 = vsel %vm863, %v358, 0
    %v1001 = vsel %vm863, %v610, 0
    %1003 = vmatpush.bf16.xpose.msra.mxu0 0
    %1004 = vmatpush.bf16.xpose.msra.mxu0 0
    %1005 = vmatpush.bf16.xpose.msra.mxu0 0
    %1006 = vmatpush.bf16.xpose.msra.mxu0 0
    %1007 = vmatpush.bf16.xpose.msra.mxu0 0
    %1008 = vmatpush.bf16.xpose.msra.mxu0 0
    %1009 = vmatpush.bf16.xpose.msra.mxu0 0
    %1010 = vmatpush.bf16.xpose.msra.mxu0 %v1001
    %1011 = vmatmul.bf16.gmra.mxu0 %v998
    %v1012 = vpop.f32.mrf.mxu0
    %v1013 = vadd.f32 0.0, %v1012
    %v1014 = vpop.f32.mrf.mxu0
    %1015 = vdwg.mxu0
    %v1016 = vsel %vm863, %v880, -inf
    %1017 = vmax.xlane.f32.xlu0 %v1016
    %v1018 = vpop.xlane.xlu0 %1017
    %v1019 = vsel %vm863, %v899, -inf
    %1020 = vmax.xlane.f32.xlu0 %v1019
    %v1021 = vpop.xlane.xlu0 %1020
    %v1022 = vsel %vm863, %v918, -inf
    %1023 = vmax.xlane.f32.xlu0 %v1022
    %v1024 = vpop.xlane.xlu0 %1023
    %v1025 = vsel %vm863, %v937, -inf
    %1026 = vmax.xlane.f32.xlu0 %v1025
    %v1027 = vpop.xlane.xlu0 %1026
    %v1028 = vsel %vm863, %v956, -inf
    %1029 = vmax.xlane.f32.xlu0 %v1028
    %v1030 = vpop.xlane.xlu0 %1029
    %v1031 = vsel %vm863, %v975, -inf
    %1032 = vmax.xlane.f32.xlu0 %v1031
    %v1033 = vpop.xlane.xlu0 %1032
    %v1034 = vsel %vm863, %v994, -inf
    %1035 = vmax.xlane.f32.xlu0 %v1034
    %v1036 = vpop.xlane.xlu0 %1035
    %v1037 = vsel %vm863, %v1013, -inf
    %1038 = vmax.xlane.f32.xlu0 %v1037
    %v1039 = vpop.xlane.xlu0 %1038
    %v1040 = vsub.f32 %v880, %v1018
    %v1041 = vsub.f32 %v899, %v1021
    %v1042 = vsub.f32 %v918, %v1024
    %v1043 = vsub.f32 %v937, %v1027
    %v1044 = vsub.f32 %v956, %v1030
    %v1045 = vsub.f32 %v975, %v1033
    %v1046 = vsub.f32 %v994, %v1036
    %v1047 = vsub.f32 %v1013, %v1039
    %v1048 = vmul.f32 %v1040, 1.442695
    %v1049 = vpow.pop %v1048
    %v1050 = vmul.f32 %v1041, 1.442695
    %v1051 = vpow.pop %v1050
    %v1052 = vmul.f32 %v1042, 1.442695
    %v1053 = vpow.pop %v1052
    %v1054 = vmul.f32 %v1043, 1.442695
    %v1055 = vpow.pop %v1054
    %v1056 = vmul.f32 %v1044, 1.442695
    %v1057 = vpow.pop %v1056
    %v1058 = vmul.f32 %v1045, 1.442695
    %v1059 = vpow.pop %v1058
    %v1060 = vmul.f32 %v1046, 1.442695
    %v1061 = vpow.pop %v1060
    %v1062 = vmul.f32 %v1047, 1.442695
    %v1063 = vpow.pop %v1062
    %v1064 = vsel %vm863, %v1049, 0.0
    %1065 = vadd.xlane.f32.xlu0 %v1064
    %v1066 = vpop.xlane.xlu0 %1065
    %v1067 = vsel %vm863, %v1051, 0.0
    %1068 = vadd.xlane.f32.xlu0 %v1067
    %v1069 = vpop.xlane.xlu0 %1068
    %v1070 = vsel %vm863, %v1053, 0.0
    %1071 = vadd.xlane.f32.xlu0 %v1070
    %v1072 = vpop.xlane.xlu0 %1071
    %v1073 = vsel %vm863, %v1055, 0.0
    %1074 = vadd.xlane.f32.xlu0 %v1073
    %v1075 = vpop.xlane.xlu0 %1074
    %v1076 = vsel %vm863, %v1057, 0.0
    %1077 = vadd.xlane.f32.xlu0 %v1076
    %v1078 = vpop.xlane.xlu0 %1077
    %v1079 = vsel %vm863, %v1059, 0.0
    %1080 = vadd.xlane.f32.xlu0 %v1079
    %v1081 = vpop.xlane.xlu0 %1080
    %v1082 = vsel %vm863, %v1061, 0.0
    %1083 = vadd.xlane.f32.xlu0 %v1082
    %v1084 = vpop.xlane.xlu0 %1083
    %v1085 = vsel %vm863, %v1063, 0.0
    %1086 = vadd.xlane.f32.xlu0 %v1085
    %v1087 = vpop.xlane.xlu0 %1086
    %v1088 = vrcp.pop %v1066
    %v1089 = vrcp.pop %v1069
    %v1090 = vrcp.pop %v1072
    %v1091 = vrcp.pop %v1075
    %v1092 = vrcp.pop %v1078
    %v1093 = vrcp.pop %v1081
    %v1094 = vrcp.pop %v1084
    %v1095 = vrcp.pop %v1087
    %v1096 = vmul.f32 %v1049, %v1088
    %v1097 = vmul.f32 %v1051, %v1089
    %v1098 = vmul.f32 %v1053, %v1090
    %v1099 = vmul.f32 %v1055, %v1091
    %v1100 = vmul.f32 %v1057, %v1092
    %v1101 = vmul.f32 %v1059, %v1093
    %v1102 = vmul.f32 %v1061, %v1094
    %v1103 = vmul.f32 %v1063, %v1095
    %v1104 = vpack.c.bf16 %v1096, %v1096
    %v1105 = vpack.c.bf16 %v1097, %v1097
    %v1106 = vpack.c.bf16 %v1098, %v1098
    %v1107 = vpack.c.bf16 %v1099, %v1099
    %v1108 = vpack.c.bf16 %v1100, %v1100
    %v1109 = vpack.c.bf16 %v1101, %v1101
    %v1110 = vpack.c.bf16 %v1102, %v1102
    %v1111 = vpack.c.bf16 %v1103, %v1103
    %v1113 = vsel %vm863, %v1104, 0
    %vm1115 = vcmask 1043456
    %v1117 = vsel %vm1115, %v855, 0
    %1119 = vmatpush.bf16.msra.mxu0 0
    %1120 = vmatpush.bf16.msra.mxu0 0
    %1121 = vmatpush.bf16.msra.mxu0 0
    %1122 = vmatpush.bf16.msra.mxu0 0
    %1123 = vmatpush.bf16.msra.mxu0 0
    %1124 = vmatpush.bf16.msra.mxu0 0
    %1125 = vmatpush.bf16.msra.mxu0 0
    %1126 = vmatpush.bf16.msra.mxu0 %v1117
    %1127 = vmatmul.bf16.gmra.mxu0 %v1113
    %v1128 = vpop.f32.mrf.mxu0
    %v1129 = vadd.f32 0.0, %v1128
    %v1130 = vpop.f32.mrf.mxu0
    %1131 = vdwg.mxu0
    %v1133 = vsel %vm863, %v1105, 0
    %v1136 = vsel %vm1115, %v856, 0
    %1138 = vmatpush.bf16.msra.mxu0 0
    %1139 = vmatpush.bf16.msra.mxu0 0
    %1140 = vmatpush.bf16.msra.mxu0 0
    %1141 = vmatpush.bf16.msra.mxu0 0
    %1142 = vmatpush.bf16.msra.mxu0 0
    %1143 = vmatpush.bf16.msra.mxu0 0
    %1144 = vmatpush.bf16.msra.mxu0 0
    %1145 = vmatpush.bf16.msra.mxu0 %v1136
    %1146 = vmatmul.bf16.gmra.mxu0 %v1133
    %v1147 = vpop.f32.mrf.mxu0
    %v1148 = vadd.f32 0.0, %v1147
    %v1149 = vpop.f32.mrf.mxu0
    %1150 = vdwg.mxu0
    %v1152 = vsel %vm863, %v1106, 0
    %v1155 = vsel %vm1115, %v857, 0
    %1157 = vmatpush.bf16.msra.mxu0 0
    %1158 = vmatpush.bf16.msra.mxu0 0
    %1159 = vmatpush.bf16.msra.mxu0 0
    %1160 = vmatpush.bf16.msra.mxu0 0
    %1161 = vmatpush.bf16.msra.mxu0 0
    %1162 = vmatpush.bf16.msra.mxu0 0
    %1163 = vmatpush.bf16.msra.mxu0 0
    %1164 = vmatpush.bf16.msra.mxu0 %v1155
    %1165 = vmatmul.bf16.gmra.mxu0 %v1152
    %v1166 = vpop.f32.mrf.mxu0
    %v1167 = vadd.f32 0.0, %v1166
    %v1168 = vpop.f32.mrf.mxu0
    %1169 = vdwg.mxu0
    %v1171 = vsel %vm863, %v1107, 0
    %v1174 = vsel %vm1115, %v858, 0
    %1176 = vmatpush.bf16.msra.mxu0 0
    %1177 = vmatpush.bf16.msra.mxu0 0
    %1178 = vmatpush.bf16.msra.mxu0 0
    %1179 = vmatpush.bf16.msra.mxu0 0
    %1180 = vmatpush.bf16.msra.mxu0 0
    %1181 = vmatpush.bf16.msra.mxu0 0
    %1182 = vmatpush.bf16.msra.mxu0 0
    %1183 = vmatpush.bf16.msra.mxu0 %v1174
    %1184 = vmatmul.bf16.gmra.mxu0 %v1171
    %v1185 = vpop.f32.mrf.mxu0
    %v1186 = vadd.f32 0.0, %v1185
    %v1187 = vpop.f32.mrf.mxu0
    %1188 = vdwg.mxu0
    %v1190 = vsel %vm863, %v1108, 0
    %v1193 = vsel %vm1115, %v859, 0
    %1195 = vmatpush.bf16.msra.mxu0 0
    %1196 = vmatpush.bf16.msra.mxu0 0
    %1197 = vmatpush.bf16.msra.mxu0 0
    %1198 = vmatpush.bf16.msra.mxu0 0
    %1199 = vmatpush.bf16.msra.mxu0 0
    %1200 = vmatpush.bf16.msra.mxu0 0
    %1201 = vmatpush.bf16.msra.mxu0 0
    %1202 = vmatpush.bf16.msra.mxu0 %v1193
    %1203 = vmatmul.bf16.gmra.mxu0 %v1190
    %v1204 = vpop.f32.mrf.mxu0
    %v1205 = vadd.f32 0.0, %v1204
    %v1206 = vpop.f32.mrf.mxu0
    %1207 = vdwg.mxu0
    %v1209 = vsel %vm863, %v1109, 0
    %v1212 = vsel %vm1115, %v860, 0
    %1214 = vmatpush.bf16.msra.mxu0 0
    %1215 = vmatpush.bf16.msra.mxu0 0
    %1216 = vmatpush.bf16.msra.mxu0 0
    %1217 = vmatpush.bf16.msra.mxu0 0
    %1218 = vmatpush.bf16.msra.mxu0 0
    %1219 = vmatpush.bf16.msra.mxu0 0
    %1220 = vmatpush.bf16.msra.mxu0 0
    %1221 = vmatpush.bf16.msra.mxu0 %v1212
    %1222 = vmatmul.bf16.gmra.mxu0 %v1209
    %v1223 = vpop.f32.mrf.mxu0
    %v1224 = vadd.f32 0.0, %v1223
    %v1225 = vpop.f32.mrf.mxu0
    %1226 = vdwg.mxu0
    %v1228 = vsel %vm863, %v1110, 0
    %v1231 = vsel %vm1115, %v861, 0
    %1233 = vmatpush.bf16.msra.mxu0 0
    %1234 = vmatpush.bf16.msra.mxu0 0
    %1235 = vmatpush.bf16.msra.mxu0 0
    %1236 = vmatpush.bf16.msra.mxu0 0
    %1237 = vmatpush.bf16.msra.mxu0 0
    %1238 = vmatpush.bf16.msra.mxu0 0
    %1239 = vmatpush.bf16.msra.mxu0 0
    %1240 = vmatpush.bf16.msra.mxu0 %v1231
    %1241 = vmatmul.bf16.gmra.mxu0 %v1228
    %v1242 = vpop.f32.mrf.mxu0
    %v1243 = vadd.f32 0.0, %v1242
    %v1244 = vpop.f32.mrf.mxu0
    %1245 = vdwg.mxu0
    %v1247 = vsel %vm863, %v1111, 0
    %v1250 = vsel %vm1115, %v862, 0
    %1252 = vmatpush.bf16.msra.mxu0 0
    %1253 = vmatpush.bf16.msra.mxu0 0
    %1254 = vmatpush.bf16.msra.mxu0 0
    %1255 = vmatpush.bf16.msra.mxu0 0
    %1256 = vmatpush.bf16.msra.mxu0 0
    %1257 = vmatpush.bf16.msra.mxu0 0
    %1258 = vmatpush.bf16.msra.mxu0 0
    %1259 = vmatpush.bf16.msra.mxu0 %v1250
    %1260 = vmatmul.bf16.gmra.mxu0 %v1247
    %v1261 = vpop.f32.mrf.mxu0
    %v1262 = vadd.f32 0.0, %v1261
    %v1263 = vpop.f32.mrf.mxu0
    %1264 = vdwg.mxu0
    %v1265 = vrot.slane %v1167, 4
    %v1266 = vsel %vm131, %v1265, %v1129
    %v1267 = vrot.slane %v1129, 4
    %v1268 = vsel %vm131, %v1167, %v1267
    %v1270 = vunpack.c.l.s4 1983009808
    %v1271 = vunpack.c.0.s8 %v1270
    %v1272 = vperm.slane %v1266, %v1271
    %v1274 = vunpack.c.l.s4 1983009808
    %v1275 = vunpack.c.0.s8 %v1274
    %v1276 = vperm.slane %v1268, %v1275
    %v1277 = vrot.slane %v1186, 4
    %v1278 = vsel %vm131, %v1277, %v1148
    %v1279 = vrot.slane %v1148, 4
    %v1280 = vsel %vm131, %v1186, %v1279
    %v1282 = vunpack.c.l.s4 1983009808
    %v1283 = vunpack.c.0.s8 %v1282
    %v1284 = vperm.slane %v1278, %v1283
    %v1286 = vunpack.c.l.s4 1983009808
    %v1287 = vunpack.c.0.s8 %v1286
    %v1288 = vperm.slane %v1280, %v1287
    %v1289 = vrot.slane %v1284, 4
    %v1290 = vsel %vm131, %v1289, %v1272
    %v1291 = vrot.slane %v1272, 4
    %v1292 = vsel %vm131, %v1284, %v1291
    %v1294 = vunpack.c.l.s4 1934713408
    %v1295 = vunpack.c.0.s8 %v1294
    %v1296 = vperm.slane %v1290, %v1295
    %v1298 = vunpack.c.l.s4 1934713408
    %v1299 = vunpack.c.0.s8 %v1298
    %v1300 = vperm.slane %v1292, %v1299
    %v1301 = vrot.slane %v1288, 4
    %v1302 = vsel %vm131, %v1301, %v1276
    %v1303 = vrot.slane %v1276, 4
    %v1304 = vsel %vm131, %v1288, %v1303
    %v1306 = vunpack.c.l.s4 1934713408
    %v1307 = vunpack.c.0.s8 %v1306
    %v1308 = vperm.slane %v1302, %v1307
    %v1310 = vunpack.c.l.s4 1934713408
    %v1311 = vunpack.c.0.s8 %v1310
    %v1312 = vperm.slane %v1304, %v1311
    %v1313 = vrot.slane %v1296, 4
    %v1314 = vsel %vm131, 0.0, %v1313
    %v1315 = vrot.slane %v1300, 4
    %v1316 = vsel %vm131, 0.0, %v1315
    %v1317 = vrot.slane %v1308, 4
    %v1318 = vsel %vm131, 0.0, %v1317
    %v1319 = vrot.slane %v1312, 4
    %v1320 = vsel %vm131, 0.0, %v1319
    %v1321 = vrot.slane %v1243, 4
    %v1322 = vsel %vm131, %v1321, %v1205
    %v1323 = vrot.slane %v1205, 4
    %v1324 = vsel %vm131, %v1243, %v1323
    %v1326 = vunpack.c.l.s4 1983009808
    %v1327 = vunpack.c.0.s8 %v1326
    %v1328 = vperm.slane %v1322, %v1327
    %v1330 = vunpack.c.l.s4 1983009808
    %v1331 = vunpack.c.0.s8 %v1330
    %v1332 = vperm.slane %v1324, %v1331
    %v1333 = vrot.slane %v1262, 4
    %v1334 = vsel %vm131, %v1333, %v1224
    %v1335 = vrot.slane %v1224, 4
    %v1336 = vsel %vm131, %v1262, %v1335
    %v1338 = vunpack.c.l.s4 1983009808
    %v1339 = vunpack.c.0.s8 %v1338
    %v1340 = vperm.slane %v1334, %v1339
    %v1342 = vunpack.c.l.s4 1983009808
    %v1343 = vunpack.c.0.s8 %v1342
    %v1344 = vperm.slane %v1336, %v1343
    %v1345 = vrot.slane %v1340, 4
    %v1346 = vsel %vm131, %v1345, %v1328
    %v1347 = vrot.slane %v1328, 4
    %v1348 = vsel %vm131, %v1340, %v1347
    %v1350 = vunpack.c.l.s4 1934713408
    %v1351 = vunpack.c.0.s8 %v1350
    %v1352 = vperm.slane %v1346, %v1351
    %v1354 = vunpack.c.l.s4 1934713408
    %v1355 = vunpack.c.0.s8 %v1354
    %v1356 = vperm.slane %v1348, %v1355
    %v1357 = vrot.slane %v1344, 4
    %v1358 = vsel %vm131, %v1357, %v1332
    %v1359 = vrot.slane %v1332, 4
    %v1360 = vsel %vm131, %v1344, %v1359
    %v1362 = vunpack.c.l.s4 1934713408
    %v1363 = vunpack.c.0.s8 %v1362
    %v1364 = vperm.slane %v1358, %v1363
    %v1366 = vunpack.c.l.s4 1934713408
    %v1367 = vunpack.c.0.s8 %v1366
    %v1368 = vperm.slane %v1360, %v1367
    %v1369 = vrot.slane %v1352, 4
    %v1370 = vsel %vm131, 0.0, %v1369
    %v1371 = vrot.slane %v1356, 4
    %v1372 = vsel %vm131, 0.0, %v1371
    %v1373 = vrot.slane %v1364, 4
    %v1374 = vsel %vm131, 0.0, %v1373
    %v1375 = vrot.slane %v1368, 4
    %v1376 = vsel %vm131, 0.0, %v1375
    %v1377 = vsel %vm131, %v1315, %v1296
    %v1379 = vunpack.c.l.s4 1983009808
    %v1380 = vunpack.c.0.s8 %v1379
    %v1381 = vperm.slane %v1377, %v1380
    %v1382 = vrot.slane %v1316, 4
    %v1383 = vsel %vm131, %v1382, %v1314
    %v1385 = vunpack.c.l.s4 1983009808
    %v1386 = vunpack.c.0.s8 %v1385
    %v1387 = vperm.slane %v1383, %v1386
    %v1388 = vsel %vm131, %v1319, %v1308
    %v1390 = vunpack.c.l.s4 1983009808
    %v1391 = vunpack.c.0.s8 %v1390
    %v1392 = vperm.slane %v1388, %v1391
    %v1393 = vrot.slane %v1320, 4
    %v1394 = vsel %vm131, %v1393, %v1318
    %v1396 = vunpack.c.l.s4 1983009808
    %v1397 = vunpack.c.0.s8 %v1396
    %v1398 = vperm.slane %v1394, %v1397
    %v1399 = vrot.slane %v1387, 4
    %v1400 = vsel %vm131, %v1399, %v1381
    %v1401 = vrot.slane %v1381, 4
    %v1402 = vsel %vm131, %v1387, %v1401
    %v1404 = vunpack.c.l.s4 1934713408
    %v1405 = vunpack.c.0.s8 %v1404
    %v1406 = vperm.slane %v1400, %v1405
    %v1408 = vunpack.c.l.s4 1934713408
    %v1409 = vunpack.c.0.s8 %v1408
    %v1410 = vperm.slane %v1402, %v1409
    %v1411 = vrot.slane %v1398, 4
    %v1412 = vsel %vm131, %v1411, %v1392
    %v1413 = vrot.slane %v1392, 4
    %v1414 = vsel %vm131, %v1398, %v1413
    %v1416 = vunpack.c.l.s4 1934713408
    %v1417 = vunpack.c.0.s8 %v1416
    %v1418 = vperm.slane %v1412, %v1417
    %v1420 = vunpack.c.l.s4 1934713408
    %v1421 = vunpack.c.0.s8 %v1420
    %v1422 = vperm.slane %v1414, %v1421
    %v1423 = vrot.slane %v1418, 4
    %v1424 = vsel %vm131, %v1423, %v1406
    %v1425 = vrot.slane %v1406, 4
    %v1426 = vsel %vm131, %v1418, %v1425
    %v1427 = vrot.slane %v1422, 4
    %v1428 = vsel %vm131, %v1427, %v1410
    %v1429 = vrot.slane %v1410, 4
    %v1430 = vsel %vm131, %v1422, %v1429
    %v1431 = vsel %vm131, %v1371, %v1352
    %v1433 = vunpack.c.l.s4 1983009808
    %v1434 = vunpack.c.0.s8 %v1433
    %v1435 = vperm.slane %v1431, %v1434
    %v1436 = vrot.slane %v1372, 4
    %v1437 = vsel %vm131, %v1436, %v1370
    %v1439 = vunpack.c.l.s4 1983009808
    %v1440 = vunpack.c.0.s8 %v1439
    %v1441 = vperm.slane %v1437, %v1440
    %v1442 = vsel %vm131, %v1375, %v1364
    %v1444 = vunpack.c.l.s4 1983009808
    %v1445 = vunpack.c.0.s8 %v1444
    %v1446 = vperm.slane %v1442, %v1445
    %v1447 = vrot.slane %v1376, 4
    %v1448 = vsel %vm131, %v1447, %v1374
    %v1450 = vunpack.c.l.s4 1983009808
    %v1451 = vunpack.c.0.s8 %v1450
    %v1452 = vperm.slane %v1448, %v1451
    %v1453 = vrot.slane %v1441, 4
    %v1454 = vsel %vm131, %v1453, %v1435
    %v1455 = vrot.slane %v1435, 4
    %v1456 = vsel %vm131, %v1441, %v1455
    %v1458 = vunpack.c.l.s4 1934713408
    %v1459 = vunpack.c.0.s8 %v1458
    %v1460 = vperm.slane %v1454, %v1459
    %v1462 = vunpack.c.l.s4 1934713408
    %v1463 = vunpack.c.0.s8 %v1462
    %v1464 = vperm.slane %v1456, %v1463
    %v1465 = vrot.slane %v1452, 4
    %v1466 = vsel %vm131, %v1465, %v1446
    %v1467 = vrot.slane %v1446, 4
    %v1468 = vsel %vm131, %v1452, %v1467
    %v1470 = vunpack.c.l.s4 1934713408
    %v1471 = vunpack.c.0.s8 %v1470
    %v1472 = vperm.slane %v1466, %v1471
    %v1474 = vunpack.c.l.s4 1934713408
    %v1475 = vunpack.c.0.s8 %v1474
    %v1476 = vperm.slane %v1468, %v1475
    %v1477 = vrot.slane %v1472, 4
    %v1478 = vsel %vm131, %v1477, %v1460
    %v1479 = vrot.slane %v1460, 4
    %v1480 = vsel %vm131, %v1472, %v1479
    %v1481 = vrot.slane %v1476, 4
    %v1482 = vsel %vm131, %v1481, %v1464
    %v1483 = vrot.slane %v1464, 4
    %v1484 = vsel %vm131, %v1476, %v1483
    %1487 = vrot.lane.b32.xlu0 %v1426, 8
    %v1488 = vpop.permute.xlu0 %1487
    %1489 = vrot.lane.b32.xlu0 %v1480, 8
    %v1490 = vpop.permute.xlu0 %1489
    %1495 = vrot.lane.b32.xlu0 %v1428, 16
    %v1496 = vpop.permute.xlu0 %1495
    %1497 = vrot.lane.b32.xlu0 %v1482, 16
    %v1498 = vpop.permute.xlu0 %1497
    %1503 = vrot.lane.b32.xlu0 %v1430, 24
    %v1504 = vpop.permute.xlu0 %1503
    %1505 = vrot.lane.b32.xlu0 %v1484, 24
    %v1506 = vpop.permute.xlu0 %1505
    %v1509 = vsel %vm863, %v1424, %v1488
    %v1510 = vsel %vm863, %v1478, %v1490
    %vm1511 = vcmask 130048
    %v1512 = vsel %vm1511, %v1509, %v1496
    %v1513 = vsel %vm1511, %v1510, %v1498
    %vm1514 = vcmask 195584
    %v1515 = vsel %vm1514, %v1512, %v1504
    %v1516 = vsel %vm1514, %v1513, %v1506
    %v1517 = vpack.c.bf16 %v1516, %v1515
    %v1518 = vld [vmem:[#allocation7] sm:$0xf]
    %v1519 = vld [vmem:[#allocation7 + $0x4] sm:$0xf]
    %v1520 = vld [vmem:[#allocation7 + $0x8] sm:$0xf]
    %v1521 = vld [vmem:[#allocation7 + $0xc] sm:$0xf]
    %v1522 = vld [vmem:[%s4] sm:$0x1]
    %v1524 = vperm.slane %v1522, 0
    %v1530 = vunpack.c.l.b16 %v1518
    %v1531 = vunpack.c.l.b16 %v1519
    %v1532 = vunpack.c.l.b16 %v1520
    %v1533 = vunpack.c.l.b16 %v1521
    %v1534 = vpack.c.b16 %v1531, %v1530
    %v1535 = vpack.c.b16 %v1533, %v1532
    %v1539 = vsel %vm92, %v1517, 0
    %1541 = vmatpush.bf16.msra.mxu0 0
    %1542 = vmatpush.bf16.msra.mxu0 0
    %1543 = vmatpush.bf16.msra.mxu0 0
    %1544 = vmatpush.bf16.msra.mxu0 0
    %1545 = vmatpush.bf16.msra.mxu0 0
    %1546 = vmatpush.bf16.msra.mxu0 0
    %1547 = vmatpush.bf16.msra.mxu0 %v1535
    %1548 = vmatpush.bf16.msra.mxu0 %v1534
    %1549 = vmatmul.bf16.gmra.mxu0 %v1539
    %v1550 = vpop.f32.mrf.mxu0
    %v1551 = vadd.f32 %v1524, %v1550
    %v1552 = vpop.f32.mrf.mxu0
    %v1553 = vadd.f32 %v1524, %v1552
    %1554 = vdwg.mxu0
    %1555 = vst.msk [vmem:[#allocation8] sm:$0xff] %vm92, %v1551
    %1556 = vst.msk [vmem:[#allocation8 + $0x8] sm:$0xff] %vm92, %v1553
    // Predicated region
    $region34: #{tpu_custom_call.1} parent=1 // pred_check
      _
    $region35: #{tpu_custom_call.1} parent=1 // pred_check_branch
      %1558 = sbr.rel (0) target = $region37
    $region36: #{tpu_custom_call.1} parent=1 // pred_region
      %1560 = vsyncadd [#allocation4], 0
      %s1561 = sshll.u32 [#allocation8], 4
      %s1562 = int_to_ptr.vmem [resolvable:$true] %s1561
      %s1563 = sshll.u32 %s5, 4
      %s1564 = int_to_ptr.hbm [resolvable:$true] %s1563
      %1569 = dma.vmem_to_hbm [thread:$0]  %s1562, 256, %s1564, [#allocation4], 128, 128, 8
    $region37: #{tpu_custom_call.1} parent=1 // pred_fallthru
      _
    // Predicated region
    $region38: #{tpu_custom_call.1} parent=1 // pred_check
      _
    $region39: #{tpu_custom_call.1} parent=1 // pred_check_branch
      %1571 = sbr.rel (0) target = $region41
    $region40: #{tpu_custom_call.1} parent=1 // pred_region
      %1573 = dma.done [#allocation4], 256
    $region41: #{tpu_custom_call.1} parent=1 // pred_fallthru
      _
    %1574 = vsyncpa [#allocation3], 1
    %1575 = vsyncpa [#allocation6], 1
    %1576 = vsyncpa [#allocation4], 1

</llo_original>
